<compile_context>
chip_gen: v5e
topology: v5e:2x2
jax: 0.10.0
libtpu: 0.0.40
codegen_flags: <defaults>
</compile_context>

<pallas_src>
import functools

import jax
import jax.numpy as jnp
import numpy as np
from jax import lax
from jax.experimental import pallas as pl
from jax.experimental.pallas import tpu as pltpu


def _round_up(n: int, m: int) -> int:
    return ((n + m - 1) // m) * m


def _layernorm(h, eps):
    # torch.nn.LayerNorm(H, elementwise_affine=False): biased variance, eps=1e-5.
    mean = jnp.mean(h, axis=-1, keepdims=True)
    centered = h - mean
    var = jnp.mean(centered * centered, axis=-1, keepdims=True)
    return centered * lax.rsqrt(var + eps)            # rsqrt -> EUP slot


def _libsize_kernel(x_ref, w1_ref, b1_ref, w2_ref, b2_ref, w3_ref, b3_ref,
                    out_ref, acc_ref, *, eps: float, negative_slope: float):
    # Grid = (batch tiles, K tiles over the n_input contraction).
    k = pl.program_id(1)

    @pl.when(k == 0)
    def _():
        acc_ref[...] = jnp.zeros_like(acc_ref)

    # Layer-1 partial contraction: bf16 x bf16 -> f32 accumulate (MXU).
    acc_ref[...] += jnp.dot(x_ref[...], w1_ref[...],
                            preferred_element_type=jnp.float32)

    @pl.when(k == pl.num_programs(1) - 1)
    def _():
        h = acc_ref[...] + b1_ref[...]
        h = jnp.maximum(_layernorm(h, eps), 0.0)                     # LN + ReLU

        h = jnp.dot(h.astype(w2_ref.dtype), w2_ref[...],
                    preferred_element_type=jnp.float32) + b2_ref[...]
        h = jnp.maximum(_layernorm(h, eps), 0.0)                     # LN + ReLU

        # Output head, lane-dense: w3 [8, H] contracted with h [tb, H] over H
        # (NT dot_general, same pattern as q @ k.T) -> [8, tb]; row 0 is real.
        yr = lax.dot_general(w3_ref[...], h,
                             dimension_numbers=(((1,), (1,)), ((), ())),
                             preferred_element_type=jnp.float32)
        y = yr[0:1, :] + b3_ref[0]
        y = jnp.where(y >= 0.0, y, negative_slope * y)               # LeakyReLU
        out_ref[...] = y.reshape(out_ref.shape)


def librarysize_encoder_forward(x, params, *, eps: float = 1e-5,
                                negative_slope: float = 0.01,
                                block_b: int = 512, block_k: int = 1024):
    """Pallas implementation of LibrarySizeEncoder.forward(x) (no covariates)."""
    B, D = x.shape
    H = params["w1"].shape[1]

    # --- batch tiling: balanced tiles (multiple of 8); ragged last tile is
    #     handled by the grid (no host jnp.pad / HBM copy of x).
    #     NB (v7x): keep n_b >= 2 when B allows so "parallel" can shard cores.
    n_b = max(1, -(-B // block_b))
    tb = _round_up(-(-B // n_b), 8)
    n_b = -(-B // tb)                     # last tile always overlaps valid rows

    # --- contraction (n_input) tiling: stream W1 in (tk, H) slabs.
    if D <= block_k:
        n_k, tk, Dp = 1, D, D
    else:
        tk = _round_up(block_k, 128)
        n_k = -(-D // tk)
        Dp = n_k * tk

    # bf16 streamed operands, f32 where precision matters.
    x_in = x.astype(jnp.bfloat16)
    w1_in = params["w1"].astype(jnp.bfloat16)
    if Dp != D:                           # exact zero-padding of the K axis
        x_in = jnp.pad(x_in, ((0, 0), (0, Dp - D)))
        w1_in = jnp.pad(w1_in, ((0, Dp - D), (0, 0)))
    w2_in = params["w2"].astype(jnp.bfloat16)
    b1_in = params["b1"].reshape(1, H).astype(jnp.float32)
    b2_in = params["b2"].reshape(1, H).astype(jnp.float32)
    w3_in = jnp.pad(params["w3"].reshape(1, H).astype(jnp.float32),
                    ((0, 7), (0, 0)))                     # (8, H), row 0 real
    b3_in = params["b3"].reshape(-1)[:1].astype(jnp.float32)   # (1,) -> SMEM

    # Explicit scoped-VMEM budget (v5e default is only 16 MiB).
    bf16_b, f32_b = 2, 4
    vmem_need = (2 * tb * tk * bf16_b       # x tile, double-buffered
                 + 2 * tk * H * bf16_b      # W1 slab
                 + 2 * H * H * bf16_b       # W2 (resident)
                 + 2 * 2 * H * f32_b        # b1, b2
                 + 2 * 8 * H * f32_b        # w3 rows
                 + 2 * tb * f32_b           # lane-dense output block
                 + tb * H * f32_b)          # f32 accumulator scratch
    vmem_limit = int(max(2 * vmem_need, 32 * 1024 * 1024))

    kernel = functools.partial(_libsize_kernel, eps=eps,
                               negative_slope=negative_slope)
    out = pl.pallas_call(
        kernel,
        out_shape=jax.ShapeDtypeStruct((n_b, 1, tb), jnp.float32),
        grid_spec=pltpu.PrefetchScalarGridSpec(
            num_scalar_prefetch=0,
            grid=(n_b, n_k),
            in_specs=[
                pl.BlockSpec((tb, tk), lambda i, k: (i, k)),        # x tile
                pl.BlockSpec((tk, H), lambda i, k: (k, 0)),         # W1 slab
                pl.BlockSpec((1, H), lambda i, k: (0, 0)),          # b1
                pl.BlockSpec((H, H), lambda i, k: (0, 0)),          # W2
                pl.BlockSpec((1, H), lambda i, k: (0, 0)),          # b2
                pl.BlockSpec((8, H), lambda i, k: (0, 0)),          # w3 rows
                pl.BlockSpec(memory_space=pltpu.MemorySpace.SMEM),  # b3 scalar
            ],
            out_specs=pl.BlockSpec((1, 1, tb), lambda i, k: (i, 0, 0)),
            scratch_shapes=[pltpu.VMEM((tb, H), jnp.float32)],      # layer-1 acc
        ),
        compiler_params=pltpu.CompilerParams(
            dimension_semantics=("parallel", "arbitrary"),
            vmem_limit_bytes=vmem_limit),
    )(x_in, w1_in, b1_in, w2_in, b2_in, w3_in, b3_in)

    # (n_b, 1, tb) lane-major tiles -> (B, 1); drop ragged tail lanes.
    return out.reshape(n_b * tb)[:B].reshape(B, 1)


def _init_params(key, n_input: int, n_hidden: int):
    """Deterministic torch.nn.Linear-style init; weights stored as [in, out]."""
    k1, k2, k3, k4, k5, k6 = jax.random.split(key, 6)
    s1 = 1.0 / np.sqrt(n_input)
    s2 = 1.0 / np.sqrt(n_hidden)
    return {
        "w1": jax.random.uniform(k1, (n_input, n_hidden), jnp.float32, -s1, s1),
        "b1": jax.random.uniform(k2, (1, n_hidden), jnp.float32, -s1, s1),
        "w2": jax.random.uniform(k3, (n_hidden, n_hidden), jnp.float32, -s2, s2),
        "b2": jax.random.uniform(k4, (1, n_hidden), jnp.float32, -s2, s2),
        "w3": jax.random.uniform(k5, (n_hidden, 1), jnp.float32, -s2, s2),
        "b3": jax.random.uniform(k6, (1, 1), jnp.float32, -s2, s2),
    }


def _reference(x, params, eps: float = 1e-5, negative_slope: float = 0.01):
    """Pure-JAX f32 mirror of the torch module forward."""
    x = x.astype(jnp.float32)
    h = x @ params["w1"] + params["b1"]
    h = jnp.maximum(_layernorm(h, eps), 0.0)
    h = h @ params["w2"] + params["b2"]
    h = jnp.maximum(_layernorm(h, eps), 0.0)
    y = h @ params["w3"] + params["b3"]
    return jnp.where(y >= 0.0, y, negative_slope * y)


if __name__ == "__main__":
    key = jax.random.PRNGKey(0)
    kx, kp = jax.random.split(key)

    B, D, H = 8, 32, 128          # batch=8, n_input=32, n_hidden=128
    x = jax.random.normal(kx, (B, D), dtype=jnp.float32)
    params = _init_params(kp, D, H)

    out = librarysize_encoder_forward(x, params)
    out = jax.block_until_ready(out)

    ref = jax.block_until_ready(_reference(x, params))
    assert out.shape == (B, 1)
    # bf16 streamed operands with f32 accumulation -> loosen tolerance vs f32 ref.
    assert np.allclose(np.asarray(out), np.asarray(ref), rtol=5e-2, atol=5e-2)

    print("KERNEL_OK")
</pallas_src>

<mosaic_0001>
module attributes {stable_mosaic.version = 11 : i64} {
  func.func @_libsize_kernel(%arg0: i32, %arg1: i32, %arg2: memref<8x32xbf16, #tpu.memory_space<vmem>>, %arg3: memref<32x128xbf16, #tpu.memory_space<vmem>>, %arg4: memref<1x128xf32, #tpu.memory_space<vmem>>, %arg5: memref<128x128xbf16, #tpu.memory_space<vmem>>, %arg6: memref<1x128xf32, #tpu.memory_space<vmem>>, %arg7: memref<8x128xf32, #tpu.memory_space<vmem>>, %arg8: memref<1xf32, #tpu.memory_space<smem>>, %arg9: memref<1x1x8xf32, #tpu.memory_space<vmem>>, %arg10: memref<8x128xf32, #tpu.memory_space<vmem>>) attributes {dimension_semantics = [#tpu.dimension_semantics<parallel>, #tpu.dimension_semantics<arbitrary>], iteration_bounds = array<i64: 1, 1>, scalar_prefetch = 0 : i64, scratch_operands = 1 : i64, tpu.core_type = #tpu.core_type<tc>, window_params = [{transform_indices = @transform_0, window_bounds = array<i64: 8, 32>}, {transform_indices = @transform_1, window_bounds = array<i64: 32, 128>}, {pipeline_mode = #tpu.pipeline_mode<synchronous>, transform_indices = @transform_2, window_bounds = array<i64: 1, 128>}, {pipeline_mode = #tpu.pipeline_mode<synchronous>, transform_indices = @transform_3, window_bounds = array<i64: 128, 128>}, {pipeline_mode = #tpu.pipeline_mode<synchronous>, transform_indices = @transform_4, window_bounds = array<i64: 1, 128>}, {pipeline_mode = #tpu.pipeline_mode<synchronous>, transform_indices = @transform_5, window_bounds = array<i64: 8, 128>}, {transform_indices = @transform_6, window_bounds = array<i64: 1>}, {transform_indices = @transform_7, window_bounds = array<i64: 1, 1, 8>}]} {
    %c0_i32 = arith.constant 0 : i32
    %0 = arith.cmpi eq, %arg1, %c0_i32 : i32
    %1 = arith.extui %0 : i1 to i32
    %c0_i32_0 = arith.constant 0 : i32
    %2 = arith.cmpi ne, %1, %c0_i32_0 : i32
    scf.if %2 {
      %cst_10 = arith.constant 0.000000e+00 : f32
      %12 = vector.broadcast %cst_10 : f32 to vector<8x128xf32>
      %c0_11 = arith.constant 0 : index
      %c0_12 = arith.constant 0 : index
      %13 = vector.load %arg10[%c0_11, %c0_12] : memref<8x128xf32, #tpu.memory_space<vmem>>, vector<8x128xf32>
      tpu.vector_store %arg10[%c0_11, %c0_12], %12 {strides = array<i32>} : memref<8x128xf32, #tpu.memory_space<vmem>>, vector<8x128xf32>,
    } else {
    }
    %c0 = arith.constant 0 : index
    %c0_1 = arith.constant 0 : index
    %3 = vector.load %arg10[%c0, %c0_1] : memref<8x128xf32, #tpu.memory_space<vmem>>, vector<8x128xf32>
    %c0_2 = arith.constant 0 : index
    %c0_3 = arith.constant 0 : index
    %4 = vector.load %arg2[%c0_2, %c0_3] : memref<8x32xbf16, #tpu.memory_space<vmem>>, vector<8x32xbf16>
    %c0_4 = arith.constant 0 : index
    %c0_5 = arith.constant 0 : index
    %5 = vector.load %arg3[%c0_4, %c0_5] : memref<32x128xbf16, #tpu.memory_space<vmem>>, vector<32x128xbf16>
    %cst = arith.constant dense<0.000000e+00> : vector<8x128xf32>
    %6 = tpu.matmul %4, %5, %cst {dimension_numbers = #tpu.dot_dimension_numbers<[1], [0], [0], [1], [0, 0, 1, 1], [], []>} : vector<8x32xbf16>, vector<32x128xbf16>, vector<8x128xf32> -> vector<8x128xf32>
    %7 = arith.addf %3, %6 : vector<8x128xf32>
    %c0_6 = arith.constant 0 : index
    %c0_7 = arith.constant 0 : index
    %8 = vector.load %arg10[%c0_6, %c0_7] : memref<8x128xf32, #tpu.memory_space<vmem>>, vector<8x128xf32>
    tpu.vector_store %arg10[%c0_6, %c0_7], %7 {strides = array<i32>} : memref<8x128xf32, #tpu.memory_space<vmem>>, vector<8x128xf32>,
    %c0_i32_8 = arith.constant 0 : i32
    %9 = arith.cmpi eq, %arg1, %c0_i32_8 : i32
    %10 = arith.extui %9 : i1 to i32
    %c0_i32_9 = arith.constant 0 : i32
    %11 = arith.cmpi ne, %10, %c0_i32_9 : i32
    scf.if %11 {
      %c0_10 = arith.constant 0 : index
      %c0_11 = arith.constant 0 : index
      %12 = vector.load %arg10[%c0_10, %c0_11] : memref<8x128xf32, #tpu.memory_space<vmem>>, vector<8x128xf32>
      %c0_12 = arith.constant 0 : index
      %c0_13 = arith.constant 0 : index
      %13 = vector.load %arg4[%c0_12, %c0_13] : memref<1x128xf32, #tpu.memory_space<vmem>>, vector<1x128xf32>
      %14 = vector.broadcast %13 : vector<1x128xf32> to vector<8x128xf32>
      %15 = arith.addf %12, %14 : vector<8x128xf32>
      %cst_14 = arith.constant dense<0.000000e+00> : vector<8xf32>
      %16 = vector.multi_reduction <add>, %15, %cst_14 [1] : vector<8x128xf32> to vector<8xf32>
      %17 = vector.shape_cast %16 : vector<8xf32> to vector<8x1xf32>
      %cst_15 = arith.constant 1.280000e+02 : f32
      %18 = vector.broadcast %cst_15 : f32 to vector<8x1xf32>
      %19 = arith.divf %17, %18 : vector<8x1xf32>
      %20 = vector.broadcast %19 : vector<8x1xf32> to vector<8x128xf32>
      %21 = arith.subf %15, %20 : vector<8x128xf32>
      %22 = arith.mulf %21, %21 : vector<8x128xf32>
      %cst_16 = arith.constant dense<0.000000e+00> : vector<8xf32>
      %23 = vector.multi_reduction <add>, %22, %cst_16 [1] : vector<8x128xf32> to vector<8xf32>
      %24 = vector.shape_cast %23 : vector<8xf32> to vector<8x1xf32>
      %cst_17 = arith.constant 1.280000e+02 : f32
      %25 = vector.broadcast %cst_17 : f32 to vector<8x1xf32>
      %26 = arith.divf %24, %25 : vector<8x1xf32>
      %cst_18 = arith.constant 9.99999974E-6 : f32
      %27 = vector.broadcast %cst_18 : f32 to vector<8x1xf32>
      %28 = arith.addf %26, %27 : vector<8x1xf32>
      %29 = math.rsqrt %28 : vector<8x1xf32>
      %30 = vector.broadcast %29 : vector<8x1xf32> to vector<8x128xf32>
      %31 = arith.mulf %21, %30 : vector<8x128xf32>
      %cst_19 = arith.constant 0.000000e+00 : f32
      %32 = vector.broadcast %cst_19 : f32 to vector<8x128xf32>
      %33 = arith.maximumf %31, %32 : vector<8x128xf32>
      %34 = arith.truncf %33 : vector<8x128xf32> to vector<8x128xbf16>
      %c0_20 = arith.constant 0 : index
      %c0_21 = arith.constant 0 : index
      %35 = vector.load %arg5[%c0_20, %c0_21] : memref<128x128xbf16, #tpu.memory_space<vmem>>, vector<128x128xbf16>
      %cst_22 = arith.constant dense<0.000000e+00> : vector<8x128xf32>
      %36 = tpu.matmul %34, %35, %cst_22 {dimension_numbers = #tpu.dot_dimension_numbers<[1], [0], [0], [1], [0, 0, 1, 1], [], []>} : vector<8x128xbf16>, vector<128x128xbf16>, vector<8x128xf32> -> vector<8x128xf32>
      %c0_23 = arith.constant 0 : index
      %c0_24 = arith.constant 0 : index
      %37 = vector.load %arg6[%c0_23, %c0_24] : memref<1x128xf32, #tpu.memory_space<vmem>>, vector<1x128xf32>
      %38 = vector.broadcast %37 : vector<1x128xf32> to vector<8x128xf32>
      %39 = arith.addf %36, %38 : vector<8x128xf32>
      %cst_25 = arith.constant dense<0.000000e+00> : vector<8xf32>
      %40 = vector.multi_reduction <add>, %39, %cst_25 [1] : vector<8x128xf32> to vector<8xf32>
      %41 = vector.shape_cast %40 : vector<8xf32> to vector<8x1xf32>
      %cst_26 = arith.constant 1.280000e+02 : f32
      %42 = vector.broadcast %cst_26 : f32 to vector<8x1xf32>
      %43 = arith.divf %41, %42 : vector<8x1xf32>
      %44 = vector.broadcast %43 : vector<8x1xf32> to vector<8x128xf32>
      %45 = arith.subf %39, %44 : vector<8x128xf32>
      %46 = arith.mulf %45, %45 : vector<8x128xf32>
      %cst_27 = arith.constant dense<0.000000e+00> : vector<8xf32>
      %47 = vector.multi_reduction <add>, %46, %cst_27 [1] : vector<8x128xf32> to vector<8xf32>
      %48 = vector.shape_cast %47 : vector<8xf32> to vector<8x1xf32>
      %cst_28 = arith.constant 1.280000e+02 : f32
      %49 = vector.broadcast %cst_28 : f32 to vector<8x1xf32>
      %50 = arith.divf %48, %49 : vector<8x1xf32>
      %cst_29 = arith.constant 9.99999974E-6 : f32
      %51 = vector.broadcast %cst_29 : f32 to vector<8x1xf32>
      %52 = arith.addf %50, %51 : vector<8x1xf32>
      %53 = math.rsqrt %52 : vector<8x1xf32>
      %54 = vector.broadcast %53 : vector<8x1xf32> to vector<8x128xf32>
      %55 = arith.mulf %45, %54 : vector<8x128xf32>
      %cst_30 = arith.constant 0.000000e+00 : f32
      %56 = vector.broadcast %cst_30 : f32 to vector<8x128xf32>
      %57 = arith.maximumf %55, %56 : vector<8x128xf32>
      %c0_31 = arith.constant 0 : index
      %c0_32 = arith.constant 0 : index
      %58 = vector.load %arg7[%c0_31, %c0_32] : memref<8x128xf32, #tpu.memory_space<vmem>>, vector<8x128xf32>
      %cst_33 = arith.constant dense<0.000000e+00> : vector<8x8xf32>
      %59 = tpu.matmul %58, %57, %cst_33 {dimension_numbers = #tpu.dot_dimension_numbers<[1], [1], [0], [0], [0, 0, 1, 0], [], []>} : vector<8x128xf32>, vector<8x128xf32>, vector<8x8xf32> -> vector<8x8xf32>
      %60 = vector.extract_strided_slice %59 {offsets = [0, 0], sizes = [1, 8], strides = [1, 1]} : vector<8x8xf32> to vector<1x8xf32>
      %c0_34 = arith.constant 0 : index
      %61 = memref.load %arg8[%c0_34] : memref<1xf32, #tpu.memory_space<smem>>
      %62 = vector.broadcast %61 : f32 to vector<1x8xf32>
      %63 = arith.addf %60, %62 : vector<1x8xf32>
      %cst_35 = arith.constant 0.000000e+00 : f32
      %64 = vector.broadcast %cst_35 : f32 to vector<1x8xf32>
      %65 = arith.cmpf oge, %63, %64 : vector<1x8xf32>
      %cst_36 = arith.constant 0.00999999977 : f32
      %66 = vector.broadcast %cst_36 : f32 to vector<1x8xf32>
      %67 = arith.mulf %66, %63 : vector<1x8xf32>
      %68 = arith.select %65, %63, %67 : vector<1x8xi1>, vector<1x8xf32>
      %69 = vector.shape_cast %68 : vector<1x8xf32> to vector<1x1x8xf32>
      %c0_37 = arith.constant 0 : index
      %c0_38 = arith.constant 0 : index
      %c0_39 = arith.constant 0 : index
      %70 = vector.load %arg9[%c0_37, %c0_38, %c0_39] : memref<1x1x8xf32, #tpu.memory_space<vmem>>, vector<1x1x8xf32>
      tpu.vector_store %arg9[%c0_37, %c0_38, %c0_39], %69 {strides = array<i32>} : memref<1x1x8xf32, #tpu.memory_space<vmem>>, vector<1x1x8xf32>,
    } else {
    }
    return
  }
  func.func @transform_0(%arg0: i32, %arg1: i32) -> (i32, i32) {
    %c0_i32 = arith.constant 0 : i32
    return %arg0, %arg1 : i32, i32
  }
  func.func @transform_1(%arg0: i32, %arg1: i32) -> (i32, i32) {
    %c0_i32 = arith.constant 0 : i32
    %c0_i32_0 = arith.constant 0 : i32
    return %arg1, %c0_i32 : i32, i32
  }
  func.func @transform_2(%arg0: i32, %arg1: i32) -> (i32, i32) {
    %c0_i32 = arith.constant 0 : i32
    %c0_i32_0 = arith.constant 0 : i32
    %c0_i32_1 = arith.constant 0 : i32
    return %c0_i32, %c0_i32_0 : i32, i32
  }
  func.func @transform_3(%arg0: i32, %arg1: i32) -> (i32, i32) {
    %c0_i32 = arith.constant 0 : i32
    %c0_i32_0 = arith.constant 0 : i32
    %c0_i32_1 = arith.constant 0 : i32
    return %c0_i32, %c0_i32_0 : i32, i32
  }
  func.func @transform_4(%arg0: i32, %arg1: i32) -> (i32, i32) {
    %c0_i32 = arith.constant 0 : i32
    %c0_i32_0 = arith.constant 0 : i32
    %c0_i32_1 = arith.constant 0 : i32
    return %c0_i32, %c0_i32_0 : i32, i32
  }
  func.func @transform_5(%arg0: i32, %arg1: i32) -> (i32, i32) {
    %c0_i32 = arith.constant 0 : i32
    %c0_i32_0 = arith.constant 0 : i32
    %c0_i32_1 = arith.constant 0 : i32
    return %c0_i32, %c0_i32_0 : i32, i32
  }
  func.func @transform_6(%arg0: i32, %arg1: i32) -> i32 {
    %c0_i32 = arith.constant 0 : i32
    %c0_i32_0 = arith.constant 0 : i32
    return %c0_i32 : i32
  }
  func.func @transform_7(%arg0: i32, %arg1: i32) -> (i32, i32, i32) {
    %c0_i32 = arith.constant 0 : i32
    %c0_i32_0 = arith.constant 0 : i32
    %c0_i32_1 = arith.constant 0 : i32
    return %arg0, %c0_i32, %c0_i32_0 : i32, i32, i32
  }
}

</mosaic_0001>

<llo_original>
// kernel: tpu_custom_call.1
$region0: #{tpu_custom_call.1}
  #allocation0 [shape = 'u32[]', space=smem, size = 0x4, offset = 0x4, fixed_abs, tag = 'smem constant byte address 0x4 - core index']
  #allocation1 [shape = 'u32[72,128]{1,0:T(1,128)}', space=vmem, size = 0x9000, scoped, tag = 'internal scratch']
  #allocation2 [shape = 'f32[8,128]{1,0:T(8,128)}', space=vmem, size = 0x1000, scoped, tag = 'scratch operand']
  #allocation3 [shape = 'f32[1]{0:T(128)S(6)}', space=smem, size = 0x200, scoped, tag = 'scoped memory for tpu_custom_call.1']
  %s0 = inlined_call_operand.hbm [shape: bf16[8,32], index: 0, kind: input, shape index: {}]
  %s1 = inlined_call_operand.hbm [shape: bf16[32,128], index: 1, kind: input, shape index: {}]
  %s2 = inlined_call_operand.vmem [shape: f32[1,128], index: 2, kind: input, shape index: {}]
  %s3 = inlined_call_operand.hbm [shape: bf16[128,128], index: 3, kind: input, shape index: {}]
  %s4 = inlined_call_operand.vmem [shape: f32[1,128], index: 4, kind: input, shape index: {}]
  %s5 = inlined_call_operand.hbm [shape: f32[8,128], index: 5, kind: input, shape index: {}]
  %s6 = inlined_call_operand.<no memory space> [shape: f32[1], index: 6, kind: input, shape index: {}]
  %s7 = inlined_call_operand.hbm [shape: f32[1,1,8], index: 7, kind: output, shape index: {}]
  %s8 = sld [smem:[#allocation0]]
  $region62: #{tpu_custom_call.1} parent=0
    _
  %s10 = ssub.s32 1, %s8
  %s11 = scalar_select 0, %s10, %s8
  %12 = sst [smem:[#allocation3]] %s6
  $region1: #{tpu_custom_call.1} parent=0
    #allocation4 [shape = 'u8[2048]{0}', space=vmem, size = 0x800, scoped, tag = 'input window, operand 0, single buffered']
    #allocation5 [shape = 's32[1]{0}', space=sflag, size = 0x4, scoped, tag = 'scoped memory for tpu_custom_call.1']
    #allocation6 [shape = 's32[1]{0}', space=sflag, size = 0x4, scoped, tag = 'scoped memory for tpu_custom_call.1']
    #allocation7 [shape = 'u8[8192]{0}', space=vmem, size = 0x2000, scoped, tag = 'input window, operand 1, single buffered']
    #allocation8 [shape = 's32[1]{0}', space=sflag, size = 0x4, scoped, tag = 'scoped memory for tpu_custom_call.1']
    #allocation9 [shape = 'u8[32768]{0}', space=vmem, size = 0x8000, scoped, tag = 'input window, operand 3, single buffered']
    #allocation10 [shape = 'u8[4096]{0}', space=vmem, size = 0x1000, scoped, tag = 'input window, operand 5, single buffered']
    #allocation11 [shape = 's32[1]{0}', space=sflag, size = 0x4, scoped, tag = 'scoped memory for tpu_custom_call.1']
    #allocation12 [shape = 'u8[512]{0}', space=vmem, size = 0x400, scoped, tag = 'output window, operand 0, single buffered']
    %13 = vsyncpa [#allocation5], 0
    %14 = vsyncpa [#allocation8], 0
    %15 = vsyncpa [#allocation11], 0
    %16 = vsyncpa [#allocation6], 0
    // Predicated region
    $region2: #{tpu_custom_call.1} parent=1 // pred_check
      _
    $region3: #{tpu_custom_call.1} parent=1 // pred_check_branch
      %18 = sbr.rel (0) target = $region5
    $region4: #{tpu_custom_call.1} parent=1 // pred_region
      %20 = vsyncadd [#allocation5], 0
      %s22 = sshll.u32 %s0, 4
      %s23 = int_to_ptr.hbm [resolvable:$true] %s22
      %s24 = sshll.u32 [#allocation4], 4
      %s25 = int_to_ptr.vmem [resolvable:$true] %s24
      %27 = dma.hbm_to_vmem [thread:$0]  %s23, 64, %s25, [#allocation5]
    $region5: #{tpu_custom_call.1} parent=1 // pred_fallthru
      _
    // Predicated region
    $region6: #{tpu_custom_call.1} parent=1 // pred_check
      _
    $region7: #{tpu_custom_call.1} parent=1 // pred_check_branch
      %29 = sbr.rel (0) target = $region9
    $region8: #{tpu_custom_call.1} parent=1 // pred_region
      %31 = vsyncadd [#allocation8], 0
      %s32 = sshll.u32 %s1, 4
      %s33 = int_to_ptr.hbm [resolvable:$true] %s32
      %s34 = sshll.u32 [#allocation7], 4
      %s35 = int_to_ptr.vmem [resolvable:$true] %s34
      %40 = dma.hbm_to_vmem [thread:$0]  %s33, 256, %s35, [#allocation8], 64, 64, 4
    $region9: #{tpu_custom_call.1} parent=1 // pred_fallthru
      _
    // Predicated region
    $region10: #{tpu_custom_call.1} parent=1 // pred_check
      _
    $region11: #{tpu_custom_call.1} parent=1 // pred_check_branch
      %42 = sbr.rel (0) target = $region13
    $region12: #{tpu_custom_call.1} parent=1 // pred_region
      _
    $region13: #{tpu_custom_call.1} parent=1 // pred_fallthru
      _
    // Predicated region
    $region14: #{tpu_custom_call.1} parent=1 // pred_check
      _
    $region15: #{tpu_custom_call.1} parent=1 // pred_check_branch
      %44 = sbr.rel (0) target = $region17
    $region16: #{tpu_custom_call.1} parent=1 // pred_region
      %46 = vsyncadd [#allocation8], 0
      %s47 = sshll.u32 %s3, 4
      %s48 = int_to_ptr.hbm [resolvable:$true] %s47
      %s49 = sshll.u32 [#allocation9], 4
      %s50 = int_to_ptr.vmem [resolvable:$true] %s49
      %55 = dma.hbm_to_vmem [thread:$0]  %s48, 1024, %s50, [#allocation8], 64, 64, 4
    $region17: #{tpu_custom_call.1} parent=1 // pred_fallthru
      _
    // Predicated region
    $region18: #{tpu_custom_call.1} parent=1 // pred_check
      _
    $region19: #{tpu_custom_call.1} parent=1 // pred_check_branch
      %57 = sbr.rel (0) target = $region21
    $region20: #{tpu_custom_call.1} parent=1 // pred_region
      _
    $region21: #{tpu_custom_call.1} parent=1 // pred_fallthru
      _
    // Predicated region
    $region22: #{tpu_custom_call.1} parent=1 // pred_check
      _
    $region23: #{tpu_custom_call.1} parent=1 // pred_check_branch
      %59 = sbr.rel (0) target = $region25
    $region24: #{tpu_custom_call.1} parent=1 // pred_region
      %61 = vsyncadd [#allocation11], 0
      %s63 = sshll.u32 %s5, 4
      %s64 = int_to_ptr.hbm [resolvable:$true] %s63
      %s65 = sshll.u32 [#allocation10], 4
      %s66 = int_to_ptr.vmem [resolvable:$true] %s65
      %68 = dma.hbm_to_vmem [thread:$0]  %s64, 128, %s66, [#allocation11]
    $region25: #{tpu_custom_call.1} parent=1 // pred_fallthru
      _
    // Predicated region
    $region26: #{tpu_custom_call.1} parent=1 // pred_check
      _
    $region27: #{tpu_custom_call.1} parent=1 // pred_check_branch
      %70 = sbr.rel (0) target = $region29
    $region28: #{tpu_custom_call.1} parent=1 // pred_region
      _
    $region29: #{tpu_custom_call.1} parent=1 // pred_fallthru
      _
    // Predicated region
    $region30: #{tpu_custom_call.1} parent=1 // pred_check
      _
    $region31: #{tpu_custom_call.1} parent=1 // pred_check_branch
      %72 = sbr.rel (0) target = $region33
    $region32: #{tpu_custom_call.1} parent=1 // pred_region
      %74 = dma.done [#allocation5], 64
    $region33: #{tpu_custom_call.1} parent=1 // pred_fallthru
      _
    // Predicated region
    $region34: #{tpu_custom_call.1} parent=1 // pred_check
      _
    $region35: #{tpu_custom_call.1} parent=1 // pred_check_branch
      %76 = sbr.rel (0) target = $region37
    $region36: #{tpu_custom_call.1} parent=1 // pred_region
      %78 = dma.done [#allocation8], 256
    $region37: #{tpu_custom_call.1} parent=1 // pred_fallthru
      _
    // Predicated region
    $region38: #{tpu_custom_call.1} parent=1 // pred_check
      _
    $region39: #{tpu_custom_call.1} parent=1 // pred_check_branch
      %80 = sbr.rel (0) target = $region41
    $region40: #{tpu_custom_call.1} parent=1 // pred_region
      %82 = dma.done [#allocation8], 1024
    $region41: #{tpu_custom_call.1} parent=1 // pred_fallthru
      _
    // Predicated region
    $region42: #{tpu_custom_call.1} parent=1 // pred_check
      _
    $region43: #{tpu_custom_call.1} parent=1 // pred_check_branch
      %84 = sbr.rel (0) target = $region45
    $region44: #{tpu_custom_call.1} parent=1 // pred_region
      %86 = dma.done [#allocation11], 128
    $region45: #{tpu_custom_call.1} parent=1 // pred_fallthru
      _
    %p88 = scmp.eq.s32.totalorder 0, 0
    // Predicated region
    $region46: #{tpu_custom_call.1} parent=1 // pred_check
      %p89 = pneg %p88
    $region47: #{tpu_custom_call.1} parent=1 // pred_check_branch
      %91 = sbr.rel (%p89) target = $region49
    $region48: #{tpu_custom_call.1} parent=1 // pred_region
      %92 = vst [vmem:[#allocation2] sm:$0xff] 0.0
    $region49: #{tpu_custom_call.1} parent=1 // pred_fallthru
      _
    %v93 = vld [vmem:[#allocation2] sm:$0xff]
    %v94 = vld [vmem:[#allocation4] sm:$0xf]
    %v95 = vld [vmem:[#allocation7] sm:$0xf]
    %v96 = vld [vmem:[#allocation7 + $0x4] sm:$0xf]
    %v97 = vld [vmem:[#allocation7 + $0x8] sm:$0xf]
    %v98 = vld [vmem:[#allocation7 + $0xc] sm:$0xf]
    %v103 = vunpack.c.l.b16 %v95
    %v104 = vunpack.c.l.b16 %v96
    %v105 = vunpack.c.l.b16 %v97
    %v106 = vunpack.c.l.b16 %v98
    %v107 = vpack.c.b16 %v104, %v103
    %v108 = vpack.c.b16 %v106, %v105
    %vm111 = vcmask 261120
    %v113 = vsel %vm111, %v94, 0
    %115 = vmatpush.bf16.msra.mxu0 0
    %116 = vmatpush.bf16.msra.mxu0 0
    %117 = vmatpush.bf16.msra.mxu0 0
    %118 = vmatpush.bf16.msra.mxu0 0
    %119 = vmatpush.bf16.msra.mxu0 0
    %120 = vmatpush.bf16.msra.mxu0 0
    %121 = vmatpush.bf16.msra.mxu0 %v108
    %122 = vmatpush.bf16.msra.mxu0 %v107
    %123 = vmatmul.bf16.gmra.mxu0 %v113
    %v124 = vpop.f32.mrf.mxu0
    %v125 = vadd.f32 0.0, %v124
    %v126 = vpop.f32.mrf.mxu0
    %127 = vdwg.mxu0
    %v128 = vadd.f32 %v93, %v125
    %129 = vst [vmem:[#allocation2] sm:$0xff] %v128
    // Predicated region
    $region50: #{tpu_custom_call.1} parent=1 // pred_check
      %p130 = pneg %p88
    $region51: #{tpu_custom_call.1} parent=1 // pred_check_branch
      %132 = sbr.rel (%p130) target = $region53
    $region52: #{tpu_custom_call.1} parent=1 // pred_region
      %v133 = vld [vmem:[#allocation2] sm:$0xff]
      %v134 = vld [vmem:[%s2] sm:$0x1]
      %v136 = vperm.slane %v134, 0
      %v138 = vadd.f32 %v133, %v136
      %139 = vadd.xlane.f32.xlu0 %v138
      %v140 = vpop.xlane.xlu0 %139
      %v141 = vrcp.pop 128.0
      %v142 = vmul.f32 128.0, %v141
      %v143 = vsub.f32 1.0, %v142
      %v144 = vmul.f32 %v141, %v143
      %v145 = vadd.f32 %v141, %v144
      %vm146 = vweird.f32 %v141
      %v147 = vsel %vm146, %v141, %v145
      %v148 = vmul.f32 %v140, %v147
      %v149 = vsub.f32 %v138, %v148
      %v150 = vmul.f32 %v149, %v149
      %151 = vadd.xlane.f32.xlu0 %v150
      %v152 = vpop.xlane.xlu0 %151
      %v153 = vmul.f32 %v152, %v147
      %v154 = vadd.f32 %v153, 1e-05
      %v155 = vrsqrt.pop %v154
      %v156 = vmul.f32 %v155, %v154
      %v157 = vmul.f32 %v156, %v155
      %v158 = vmul.f32 0.5, %v157
      %v159 = vsub.f32 1.5, %v158
      %v160 = vmul.f32 %v155, %v159
      %vm161 = vweird.f32 %v154
      %vm162 = vweird.f32 %v155
      %vm163 = vmor %vm161, %vm162
      %v164 = vsel %vm163, %v155, %v160
      %v165 = vmul.f32 %v149, %v164
      %v166 = vmax.f32 %v165, 0.0
      %v167 = vpack.c.bf16 %v166, %v166
      %v168 = vld [vmem:[#allocation9] sm:$0xf]
      %v169 = vld [vmem:[#allocation9 + $0x4] sm:$0xf]
      %v170 = vld [vmem:[#allocation9 + $0x8] sm:$0xf]
      %v171 = vld [vmem:[#allocation9 + $0xc] sm:$0xf]
      %v172 = vld [vmem:[#allocation9 + $0x10] sm:$0xf]
      %v173 = vld [vmem:[#allocation9 + $0x14] sm:$0xf]
      %v174 = vld [vmem:[#allocation9 + $0x18] sm:$0xf]
      %v175 = vld [vmem:[#allocation9 + $0x1c] sm:$0xf]
      %v176 = vld [vmem:[#allocation9 + $0x20] sm:$0xf]
      %v177 = vld [vmem:[#allocation9 + $0x24] sm:$0xf]
      %v178 = vld [vmem:[#allocation9 + $0x28] sm:$0xf]
      %v179 = vld [vmem:[#allocation9 + $0x2c] sm:$0xf]
      %v180 = vld [vmem:[#allocation9 + $0x30] sm:$0xf]
      %v181 = vld [vmem:[#allocation9 + $0x34] sm:$0xf]
      %v182 = vld [vmem:[#allocation9 + $0x38] sm:$0xf]
      %v183 = vld [vmem:[#allocation9 + $0x3c] sm:$0xf]
      %v184 = vld [vmem:[%s4] sm:$0x1]
      %v186 = vperm.slane %v184, 0
      %v204 = vunpack.c.l.b16 %v168
      %v205 = vunpack.c.l.b16 %v169
      %v206 = vunpack.c.l.b16 %v170
      %v207 = vunpack.c.l.b16 %v171
      %v208 = vunpack.c.l.b16 %v172
      %v209 = vunpack.c.l.b16 %v173
      %v210 = vunpack.c.l.b16 %v174
      %v211 = vunpack.c.l.b16 %v175
      %v212 = vunpack.c.l.b16 %v176
      %v213 = vunpack.c.l.b16 %v177
      %v214 = vunpack.c.l.b16 %v178
      %v215 = vunpack.c.l.b16 %v179
      %v216 = vunpack.c.l.b16 %v180
      %v217 = vunpack.c.l.b16 %v181
      %v218 = vunpack.c.l.b16 %v182
      %v219 = vunpack.c.l.b16 %v183
      %v220 = vpack.c.b16 %v205, %v204
      %v221 = vpack.c.b16 %v207, %v206
      %v222 = vpack.c.b16 %v209, %v208
      %v223 = vpack.c.b16 %v211, %v210
      %v224 = vpack.c.b16 %v213, %v212
      %v225 = vpack.c.b16 %v215, %v214
      %v226 = vpack.c.b16 %v217, %v216
      %v227 = vpack.c.b16 %v219, %v218
      %236 = vmatpush.bf16.msra.mxu0 %v227
      %237 = vmatpush.bf16.msra.mxu0 %v226
      %238 = vmatpush.bf16.msra.mxu0 %v225
      %239 = vmatpush.bf16.msra.mxu0 %v224
      %240 = vmatpush.bf16.msra.mxu0 %v223
      %241 = vmatpush.bf16.msra.mxu0 %v222
      %242 = vmatpush.bf16.msra.mxu0 %v221
      %243 = vmatpush.bf16.msra.mxu0 %v220
      %244 = vmatmul.bf16.gmra.mxu0 %v167
      %v245 = vpop.f32.mrf.mxu0
      %v246 = vadd.f32 %v186, %v245
      %v247 = vpop.f32.mrf.mxu0
      %248 = vdwg.mxu0
      %249 = vadd.xlane.f32.xlu0 %v246
      %v250 = vpop.xlane.xlu0 %249
      %v251 = vmul.f32 %v250, %v147
      %v252 = vsub.f32 %v246, %v251
      %v253 = vmul.f32 %v252, %v252
      %254 = vadd.xlane.f32.xlu0 %v253
      %v255 = vpop.xlane.xlu0 %254
      %v256 = vmul.f32 %v255, %v147
      %v257 = vadd.f32 %v256, 1e-05
      %v258 = vrsqrt.pop %v257
      %v259 = vmul.f32 %v258, %v257
      %v260 = vmul.f32 %v259, %v258
      %v261 = vmul.f32 0.5, %v260
      %v262 = vsub.f32 1.5, %v261
      %v263 = vmul.f32 %v258, %v262
      %vm264 = vweird.f32 %v257
      %vm265 = vweird.f32 %v258
      %vm266 = vmor %vm264, %vm265
      %v267 = vsel %vm266, %v258, %v263
      %v268 = vmul.f32 %v252, %v267
      %v269 = vmax.f32 %v268, 0.0
      %v270 = vld [vmem:[#allocation10] sm:$0xff]
      %271 = vmatpush.xpose.msra.mxu0 0.0
      %272 = vmatpush.xpose.msra.mxu0 0.0
      %273 = vmatpush.xpose.msra.mxu0 0.0
      %274 = vmatpush.xpose.msra.mxu0 0.0
      %275 = vmatpush.xpose.msra.mxu0 0.0
      %276 = vmatpush.xpose.msra.mxu0 0.0
      %277 = vmatpush.xpose.msra.mxu0 0.0
      %278 = vmatpush.xpose.msra.mxu0 0.0
      %279 = vmatpush.xpose.msra.mxu0 0.0
      %280 = vmatpush.xpose.msra.mxu0 0.0
      %281 = vmatpush.xpose.msra.mxu0 0.0
      %282 = vmatpush.xpose.msra.mxu0 0.0
      %283 = vmatpush.xpose.msra.mxu0 0.0
      %284 = vmatpush.xpose.msra.mxu0 0.0
      %285 = vmatpush.xpose.msra.mxu0 0.0
      %286 = vmatpush.xpose.msra.mxu0 %v269
      %287 = vmatmul.f32.gmra.mxu0 %v270
      %v288 = vpop.f32.mrf.mxu0
      %v289 = vadd.f32 0.0, %v288
      %290 = vdwg.mxu0
      %s291 = sld [smem:[#allocation3]]
      %v292 = vstv %s291
      %v293 = vadd.f32 %v289, %v292
      %vm294 = vcmp.ge.f32.partialorder %v293, 0.0
      %v295 = vmul.f32 %v293, 0.01
      %v296 = vsel %vm294, %v293, %v295
      %vm297 = vcmask 57344
      %298 = vst.msk [vmem:[#allocation12] sm:$0x1] %vm297, %v296
    $region53: #{tpu_custom_call.1} parent=1 // pred_fallthru
      _
    // Predicated region
    $region54: #{tpu_custom_call.1} parent=1 // pred_check
      _
    $region55: #{tpu_custom_call.1} parent=1 // pred_check_branch
      %300 = sbr.rel (0) target = $region57
    $region56: #{tpu_custom_call.1} parent=1 // pred_region
      %302 = vsyncadd [#allocation6], 0
      %s304 = sshll.u32 [#allocation12], 4
      %s305 = int_to_ptr.vmem [resolvable:$true] %s304
      %s306 = sshll.u32 %s7, 4
      %s307 = int_to_ptr.hbm [resolvable:$true] %s306
      %309 = dma.vmem_to_hbm [thread:$0]  %s305, 16, %s307, [#allocation6]
    $region57: #{tpu_custom_call.1} parent=1 // pred_fallthru
      _
    // Predicated region
    $region58: #{tpu_custom_call.1} parent=1 // pred_check
      _
    $region59: #{tpu_custom_call.1} parent=1 // pred_check_branch
      %311 = sbr.rel (0) target = $region61
    $region60: #{tpu_custom_call.1} parent=1 // pred_region
      %313 = dma.done [#allocation6], 16
    $region61: #{tpu_custom_call.1} parent=1 // pred_fallthru
      _
    %314 = vsyncpa [#allocation5], 1
    %315 = vsyncpa [#allocation8], 1
    %316 = vsyncpa [#allocation11], 1
    %317 = vsyncpa [#allocation6], 1

</llo_original>
